<compile_context>
chip_gen: v6e
topology: v6e:2x2x1
jax: 0.10.0
libtpu: 0.0.40
codegen_flags: <defaults>
</compile_context>

<pallas_src>
import functools

import jax
import jax.numpy as jnp
from jax import lax
from jax.experimental import pallas as pl
from jax.experimental.pallas import tpu as pltpu


# ----------------------------------------------------------------------------
# Kernel 1: fused QKV projection.  One wide MXU matmul per (batch, t-tile);
# the softmax scale is folded into Q here.
# ----------------------------------------------------------------------------
def _qkv_proj_kernel(x_ref, w_ref, q_ref, k_ref, v_ref):
    C = x_ref.shape[-1]            # n_embedding (static)
    Dp = q_ref.shape[-1]           # padded head size (static, multiple of 128)
    scale = jnp.float32(C ** -0.5)

    x = x_ref[0]                                               # (tt, C)
    qkv = jnp.dot(x, w_ref[...], preferred_element_type=jnp.float32)  # (tt, 3Dp)
    # Slices land on 128-lane boundaries (Dp % 128 == 0) -> no relayout.
    q_ref[0] = (qkv[:, :Dp] * scale).astype(q_ref.dtype)
    k_ref[0] = qkv[:, Dp:2 * Dp].astype(k_ref.dtype)
    v_ref[0] = qkv[:, 2 * Dp:].astype(v_ref.dtype)


# ----------------------------------------------------------------------------
# Kernel 2: causal flash attention (online softmax) over precomputed Q/K/V.
# ----------------------------------------------------------------------------
def _flash_attn_kernel(q_ref, k_ref, v_ref, o_ref, m_sc, l_sc, acc_sc, *,
                       approx_recip):
    qi = pl.program_id(1)          # q-tile index
    ki = pl.program_id(2)          # kv-tile index (innermost, reduction)
    nk = pl.num_programs(2)

    @pl.when(ki == 0)
    def _init():
        m_sc[...] = jnp.full(m_sc.shape, -jnp.inf, dtype=jnp.float32)
        l_sc[...] = jnp.zeros(l_sc.shape, dtype=jnp.float32)
        acc_sc[...] = jnp.zeros(acc_sc.shape, dtype=jnp.float32)

    # Tiles entirely above the causal diagonal (ki > qi) are skipped; their
    # K/V index_map is clamped to the diagonal block so they also do no DMA.
    @pl.when(ki <= qi)
    def _compute():
        q = q_ref[0]                                           # (tq, Dp), pre-scaled
        k = k_ref[0]                                           # (tkv, Dp)
        v = v_ref[0]                                           # (tkv, Dp)
        s = jnp.einsum('td,sd->ts', q, k,
                       preferred_element_type=jnp.float32)     # (tq, tkv), f32

        def online_update(scores):
            m_prev = m_sc[...]
            m_new = jnp.maximum(m_prev, jnp.max(scores, axis=-1, keepdims=True))
            alpha = jnp.exp(m_prev - m_new)
            p = jnp.exp(scores - m_new)
            l_sc[...] = alpha * l_sc[...] + jnp.sum(p, axis=-1, keepdims=True)
            acc_sc[...] = alpha * acc_sc[...] + jnp.dot(
                p.astype(v.dtype), v, preferred_element_type=jnp.float32)
            m_sc[...] = m_new

        @pl.when(ki < qi)            # strictly below the diagonal: no mask
        def _():
            online_update(s)

        @pl.when(ki == qi)           # diagonal tile: local causal mask
        def _():
            row = lax.broadcasted_iota(jnp.int32, s.shape, 0)
            col = lax.broadcasted_iota(jnp.int32, s.shape, 1)
            online_update(jnp.where(row >= col, s, -jnp.inf))

    @pl.when(ki == nk - 1)
    def _finalize():
        inv = pl.reciprocal(l_sc[...], approx=approx_recip)
        o_ref[0] = (acc_sc[...] * inv).astype(o_ref.dtype)

    # TODO(synk): dropout on attention weights is identity (eval-mode semantics).


# ----------------------------------------------------------------------------
# Wrapper
# ----------------------------------------------------------------------------
def head_attention(x, wq, wk, wv, *, tq=None, tkv=None, proj_tile=None,
                   fast=True):
    """x: (B, T, C); wq/wk/wv: (C, D) input-major. Returns (B, T, D).

    fast=True  -> bf16 MXU operands (f32 accumulation) + approx reciprocal.
    fast=False -> full f32 path (bit-faithful to the reference within 1e-5).
    """
    B, T, C = x.shape
    D = wq.shape[1]
    Dp = ((D + 127) // 128) * 128          # lane-dense padded head size

    compute_dtype = jnp.bfloat16 if fast else jnp.float32

    # Pack + zero-pad the projection weights into one (C, 3*Dp) operand.
    def _pad(w):
        return jnp.pad(w, ((0, 0), (0, Dp - D)))
    wqkv = jnp.concatenate([_pad(wq), _pad(wk), _pad(wv)], axis=1)
    wqkv = wqkv.astype(compute_dtype)
    x_c = x.astype(compute_dtype)

    # --- projection pass ------------------------------------------------
    tt = (min(T, 256) if proj_tile is None else proj_tile)
    assert T % tt == 0, "T must be divisible by the projection tile"

    q, k, v = pl.pallas_call(
        _qkv_proj_kernel,
        out_shape=[jax.ShapeDtypeStruct((B, T, Dp), compute_dtype)] * 3,
        grid=(B, T // tt),
        in_specs=[
            pl.BlockSpec((1, tt, C), lambda b, ti: (b, ti, 0)),
            pl.BlockSpec((C, 3 * Dp), lambda b, ti: (0, 0)),
        ],
        out_specs=[pl.BlockSpec((1, tt, Dp), lambda b, ti: (b, ti, 0))] * 3,
        compiler_params=pltpu.CompilerParams(
            dimension_semantics=("parallel", "parallel")),
    )(x_c, wqkv)

    # --- attention pass ---------------------------------------------------
    tq = min(T, 256) if tq is None else tq        # 256 fills the v6e/v7x MXU;
    tkv = min(T, 256) if tkv is None else tkv     # sweep 128 on v5e.
    assert T % tq == 0 and T % tkv == 0, "T must be divisible by the tile sizes"
    assert tq == tkv, "causal tile-skip logic assumes square tiles"
    nq, nk = T // tq, T // tkv

    kernel = functools.partial(_flash_attn_kernel, approx_recip=fast)

    # Clamp the K/V block index to min(ki, qi): fully-masked steps reuse the
    # resident diagonal block, so no DMA is issued for skipped tiles.
    kv_index_map = lambda b, qi, ki: (b, jnp.minimum(ki, qi), 0)

    out_p = pl.pallas_call(
        kernel,
        out_shape=jax.ShapeDtypeStruct((B, T, Dp), x.dtype),
        grid=(B, nq, nk),
        in_specs=[
            pl.BlockSpec((1, tq, Dp), lambda b, qi, ki: (b, qi, 0)),
            # If profiling shows exposed K/V DMA after the bf16/big-tile
            # changes, add pipeline_mode=pl.Buffered(3) to these two specs.
            pl.BlockSpec((1, tkv, Dp), kv_index_map),
            pl.BlockSpec((1, tkv, Dp), kv_index_map),
        ],
        out_specs=pl.BlockSpec((1, tq, Dp), lambda b, qi, ki: (b, qi, 0)),
        scratch_shapes=[
            pltpu.VMEM((tq, 1), jnp.float32),    # running max
            pltpu.VMEM((tq, 1), jnp.float32),    # running denominator
            pltpu.VMEM((tq, Dp), jnp.float32),   # output accumulator
        ],
        compiler_params=pltpu.CompilerParams(
            dimension_semantics=("parallel", "parallel", "arbitrary"),
            vmem_limit_bytes=32 * 1024 * 1024),
    )(q, k, v)

    return out_p[:, :, :D]


def reference_head(x, wq, wk, wv):
    """Pure-JAX mirror of the PyTorch Head.forward (eval mode)."""
    B, T, C = x.shape
    q = x @ wq
    k = x @ wk
    v = x @ wv
    wei = jnp.einsum('btd,bsd->bts', q, k) * (C ** -0.5)
    mask = jnp.tril(jnp.ones((T, T), dtype=bool))
    wei = jnp.where(mask[None], wei, -jnp.inf)
    wei = jax.nn.softmax(wei, axis=-1)
    return jnp.einsum('bts,bsd->btd', wei, v)


if __name__ == "__main__":
    # Small shapes consistent with the module: batch=2, seq=16 (<= BLOCK_SIZE),
    # n_embedding=32, head_size=16. tq=tkv=8 so the grid actually exercises
    # below-diagonal, diagonal, and skipped (fully masked) KV tiles.
    B, T, C, D = 2, 16, 32, 16

    key = jax.random.PRNGKey(0)
    kx, kq, kk, kv = jax.random.split(key, 4)

    x = jax.random.normal(kx, (B, T, C), dtype=jnp.float32)
    # nn.Linear(C, D, bias=False) weights stored input-major (C, D).
    wq = jax.random.normal(kq, (C, D), dtype=jnp.float32) * 0.1
    wk = jax.random.normal(kk, (C, D), dtype=jnp.float32) * 0.1
    wv = jax.random.normal(kv, (C, D), dtype=jnp.float32) * 0.1

    ref = reference_head(x, wq, wk, wv)

    # Precise path (f32 operands, exact reciprocal): strict reference check.
    out_f32 = head_attention(x, wq, wk, wv, tq=8, tkv=8, proj_tile=8,
                             fast=False)
    out_f32 = jax.block_until_ready(out_f32)
    assert out_f32.shape == (B, T, D)
    assert jnp.allclose(out_f32, ref, atol=1e-5, rtol=1e-5), \
        "f32 path mismatch vs reference"

    # Fast path (bf16 MXU operands + approx reciprocal): relaxed check.
    out_fast = head_attention(x, wq, wk, wv, tq=8, tkv=8, proj_tile=8,
                              fast=True)
    out_fast = jax.block_until_ready(out_fast)
    assert out_fast.shape == (B, T, D)
    assert jnp.allclose(out_fast, ref, atol=2e-2, rtol=2e-2), \
        "bf16 fast path mismatch vs reference"

    print("KERNEL_OK")
</pallas_src>

<mosaic_0001>
module attributes {stable_mosaic.version = 11 : i64} {
  func.func @_qkv_proj_kernel(%arg0: i32, %arg1: i32, %arg2: memref<1x8x32xf32, #tpu.memory_space<vmem>>, %arg3: memref<32x384xf32, #tpu.memory_space<vmem>>, %arg4: memref<1x8x128xf32, #tpu.memory_space<vmem>>, %arg5: memref<1x8x128xf32, #tpu.memory_space<vmem>>, %arg6: memref<1x8x128xf32, #tpu.memory_space<vmem>>) attributes {dimension_semantics = [#tpu.dimension_semantics<parallel>, #tpu.dimension_semantics<parallel>], iteration_bounds = array<i64: 2, 2>, scalar_prefetch = 0 : i64, scratch_operands = 0 : i64, tpu.core_type = #tpu.core_type<tc>, window_params = [{transform_indices = @transform_0, window_bounds = array<i64: 1, 8, 32>}, {pipeline_mode = #tpu.pipeline_mode<synchronous>, transform_indices = @transform_1, window_bounds = array<i64: 32, 384>}, {transform_indices = @transform_2, window_bounds = array<i64: 1, 8, 128>}, {transform_indices = @transform_3, window_bounds = array<i64: 1, 8, 128>}, {transform_indices = @transform_4, window_bounds = array<i64: 1, 8, 128>}]} {
    %c0 = arith.constant 0 : index
    %c0_0 = arith.constant 0 : index
    %c0_1 = arith.constant 0 : index
    %0 = vector.load %arg2[%c0, %c0_0, %c0_1] : memref<1x8x32xf32, #tpu.memory_space<vmem>>, vector<1x8x32xf32>
    %1 = vector.shape_cast %0 : vector<1x8x32xf32> to vector<8x32xf32>
    %c0_2 = arith.constant 0 : index
    %c0_3 = arith.constant 0 : index
    %2 = vector.load %arg3[%c0_2, %c0_3] : memref<32x384xf32, #tpu.memory_space<vmem>>, vector<32x384xf32>
    %cst = arith.constant dense<0.000000e+00> : vector<8x384xf32>
    %3 = tpu.matmul %1, %2, %cst {dimension_numbers = #tpu.dot_dimension_numbers<[1], [0], [0], [1], [0, 0, 1, 1], [], []>} : vector<8x32xf32>, vector<32x384xf32>, vector<8x384xf32> -> vector<8x384xf32>
    %4 = vector.extract_strided_slice %3 {offsets = [0, 0], sizes = [8, 128], strides = [1, 1]} : vector<8x384xf32> to vector<8x128xf32>
    %cst_4 = arith.constant 0.176776692 : f32
    %5 = vector.broadcast %cst_4 : f32 to vector<8x128xf32>
    %6 = arith.mulf %4, %5 : vector<8x128xf32>
    %c0_5 = arith.constant 0 : index
    %c0_6 = arith.constant 0 : index
    %c0_7 = arith.constant 0 : index
    %7 = vector.load %arg4[%c0_5, %c0_6, %c0_7] : memref<1x8x128xf32, #tpu.memory_space<vmem>>, vector<1x8x128xf32>
    %8 = vector.shape_cast %7 : vector<1x8x128xf32> to vector<8x128xf32>
    %9 = vector.shape_cast %6 : vector<8x128xf32> to vector<1x8x128xf32>
    tpu.vector_store %arg4[%c0_5, %c0_6, %c0_7], %9 {strides = array<i32>} : memref<1x8x128xf32, #tpu.memory_space<vmem>>, vector<1x8x128xf32>,
    %10 = vector.extract_strided_slice %3 {offsets = [0, 128], sizes = [8, 128], strides = [1, 1]} : vector<8x384xf32> to vector<8x128xf32>
    %c0_8 = arith.constant 0 : index
    %c0_9 = arith.constant 0 : index
    %c0_10 = arith.constant 0 : index
    %11 = vector.load %arg5[%c0_8, %c0_9, %c0_10] : memref<1x8x128xf32, #tpu.memory_space<vmem>>, vector<1x8x128xf32>
    %12 = vector.shape_cast %11 : vector<1x8x128xf32> to vector<8x128xf32>
    %13 = vector.shape_cast %10 : vector<8x128xf32> to vector<1x8x128xf32>
    tpu.vector_store %arg5[%c0_8, %c0_9, %c0_10], %13 {strides = array<i32>} : memref<1x8x128xf32, #tpu.memory_space<vmem>>, vector<1x8x128xf32>,
    %14 = vector.extract_strided_slice %3 {offsets = [0, 256], sizes = [8, 128], strides = [1, 1]} : vector<8x384xf32> to vector<8x128xf32>
    %c0_11 = arith.constant 0 : index
    %c0_12 = arith.constant 0 : index
    %c0_13 = arith.constant 0 : index
    %15 = vector.load %arg6[%c0_11, %c0_12, %c0_13] : memref<1x8x128xf32, #tpu.memory_space<vmem>>, vector<1x8x128xf32>
    %16 = vector.shape_cast %15 : vector<1x8x128xf32> to vector<8x128xf32>
    %17 = vector.shape_cast %14 : vector<8x128xf32> to vector<1x8x128xf32>
    tpu.vector_store %arg6[%c0_11, %c0_12, %c0_13], %17 {strides = array<i32>} : memref<1x8x128xf32, #tpu.memory_space<vmem>>, vector<1x8x128xf32>,
    return
  }
  func.func @transform_0(%arg0: i32, %arg1: i32) -> (i32, i32, i32) {
    %c0_i32 = arith.constant 0 : i32
    %c0_i32_0 = arith.constant 0 : i32
    return %arg0, %arg1, %c0_i32 : i32, i32, i32
  }
  func.func @transform_1(%arg0: i32, %arg1: i32) -> (i32, i32) {
    %c0_i32 = arith.constant 0 : i32
    %c0_i32_0 = arith.constant 0 : i32
    %c0_i32_1 = arith.constant 0 : i32
    return %c0_i32, %c0_i32_0 : i32, i32
  }
  func.func @transform_2(%arg0: i32, %arg1: i32) -> (i32, i32, i32) {
    %c0_i32 = arith.constant 0 : i32
    %c0_i32_0 = arith.constant 0 : i32
    return %arg0, %arg1, %c0_i32 : i32, i32, i32
  }
  func.func @transform_3(%arg0: i32, %arg1: i32) -> (i32, i32, i32) {
    %c0_i32 = arith.constant 0 : i32
    %c0_i32_0 = arith.constant 0 : i32
    return %arg0, %arg1, %c0_i32 : i32, i32, i32
  }
  func.func @transform_4(%arg0: i32, %arg1: i32) -> (i32, i32, i32) {
    %c0_i32 = arith.constant 0 : i32
    %c0_i32_0 = arith.constant 0 : i32
    return %arg0, %arg1, %c0_i32 : i32, i32, i32
  }
}

</mosaic_0001>

<llo_original>
// kernel: tpu_custom_call.1
$region0: #{tpu_custom_call.1}
  #allocation0 [shape = 'u32[]', space=smem, size = 0x4, offset = 0x4, fixed_abs, tag = 'smem constant byte address 0x4 - core index']
  #allocation1 [shape = 'u32[144,128]{1,0:T(1,128)}', space=vmem, size = 0x12000, scoped, tag = 'internal scratch']
  %s0 = inlined_call_operand.hbm [shape: f32[2,16,32], index: 0, kind: input, shape index: {}]
  %s1 = inlined_call_operand.hbm [shape: f32[32,384], index: 1, kind: input, shape index: {}]
  %s2 = inlined_call_operand.hbm [shape: f32[2,16,128], index: 2, kind: output, shape index: {0}]
  %s3 = inlined_call_operand.hbm [shape: f32[2,16,128], index: 3, kind: output, shape index: {1}]
  %s4 = inlined_call_operand.hbm [shape: f32[2,16,128], index: 4, kind: output, shape index: {2}]
  %5 = xla_tuple %s2, %s3, %s4
  %s6 = sld [smem:[#allocation0]]
  $region65: #{tpu_custom_call.1} parent=0
    _
  %s8 = ssub.s32 1, %s6
  %s9 = scalar_select 0, %s8, %s6
  $region1: #{tpu_custom_call.1} parent=0
    #allocation2 [shape = 'u8[8192]{0}', space=vmem, size = 0x2000, scoped, tag = 'input window, operand 0']
    #allocation3 [shape = 's32[2]{0}', space=sflag, size = 0x8, scoped, tag = 'scoped memory for tpu_custom_call.1']
    #allocation4 [shape = 's32[2]{0}', space=sflag, size = 0x8, scoped, tag = 'scoped memory for tpu_custom_call.1']
    #allocation5 [shape = 'u8[49152]{0}', space=vmem, size = 0xc000, scoped, tag = 'input window, operand 1, single buffered']
    #allocation6 [shape = 's32[1]{0}', space=sflag, size = 0x4, scoped, tag = 'scoped memory for tpu_custom_call.1']
    #allocation7 [shape = 'u8[8192]{0}', space=vmem, size = 0x2000, scoped, tag = 'output window, operand 0']
    #allocation8 [shape = 'u8[8192]{0}', space=vmem, size = 0x2000, scoped, tag = 'output window, operand 1']
    #allocation9 [shape = 's32[2]{0}', space=sflag, size = 0x8, scoped, tag = 'scoped memory for tpu_custom_call.1']
    #allocation10 [shape = 'u8[8192]{0}', space=vmem, size = 0x2000, scoped, tag = 'output window, operand 2']
    %10 = vsyncpa [#allocation3], 0
    %s11 = scalar_lea.sflag [#allocation3], 1
    %12 = vsyncpa %s11, 0
    %13 = vsyncpa [#allocation6], 0
    %14 = vsyncpa [#allocation4], 0
    %s15 = scalar_lea.sflag [#allocation4], 1
    %16 = vsyncpa %s15, 0
    %17 = vsyncpa [#allocation9], 0
    %s18 = scalar_lea.sflag [#allocation9], 1
    %19 = vsyncpa %s18, 0
    loop: start=0, step=1, limit=6
    $region2: #{tpu_custom_call.1} parent=1 // loop_pre_header
      _
    $region3: #{tpu_custom_call.1} parent=1 // loop_header
      %s21 = sphi 0, %s25
      %p22 = scmp.ge.s32.totalorder %s21, 6
      %s28 = sphi 0, %s40
      %s29 = sphi 0, %s36
      %s30 = sphi 0, %s28
      %s31 = sphi 0, %s29
      %s32 = sphi 0, %s30
      %s33 = sphi 0, %s31
      %s45 = sphi 0, %s47
      %s48 = sphi 0, %s45
      %s49 = sphi 0, %s48
      %s65 = sphi 0, %s49
      %s69 = sphi 0, %s69
      %s71 = sphi 0, %s69
      %s72 = sphi 0, %s71
      %s86 = sphi 0, %s72
      %s94 = sphi 0, %s96
      %s97 = sphi 0, %s94
      %s98 = sphi 0, %s97
      %s114 = sphi 0, %s98
      %s122 = sphi 0, %s124
      %s125 = sphi 0, %s122
      %s126 = sphi 0, %s125
      %s142 = sphi 0, %s126
      %s150 = sphi 0, %s152
      %s153 = sphi 0, %s150
      %s154 = sphi 0, %s153
      %s170 = sphi 0, %s154
    $region4: #{tpu_custom_call.1} parent=1 // loop_header_branch
      %24 = sbr.rel (%p22) target = $region8
    $region5: #{tpu_custom_call.1} parent=1 // loop_body
      %s26 = ssub.s32 %s21, 1
      %s27 = ssub.s32 %s21, 2
      %s34 = sadd.s32 1, %s29
      %p35 = scmp.ge.s32.totalorder %s34, 2
      %s36 = scalar_select %p35, 0, %s34
      %s37 = sadd.s32 1, %s28
      %s38 = scalar_select %p35, %s37, %s28
      %p39 = scmp.ge.s32.totalorder %s38, 2
      %s40 = scalar_select %p39, 0, %s38
      %s41 = ssub.s32 %s28, %s40
      %s42 = ssub.s32 %s29, %s36
      %s43 = sor.u32 %s41, %s42
      %p44 = scmp.eq.s32.totalorder %s43, 0
      %s46 = sadd.s32 %s45, 1
      %s47 = scalar_select %p44, %s45, %s46
      %p50 = pneg %p44
      %p51 = scmp.eq.s32.totalorder %s21, 3
      %p52 = por %p50, %p51
      %p53 = scmp.ne.s32.totalorder %s45, %s48
      %p54 = scmp.eq.s32.totalorder %s21, 0
      %p55 = por %p53, %p54
      %p56 = scmp.ne.s32.totalorder %s45, %s48
      %p57 = scmp.eq.s32.totalorder %s26, 3
      %p58 = por %p56, %p57
      %p59 = scmp.ne.s32.totalorder %s48, %s49
      %p60 = scmp.eq.s32.totalorder %s26, 0
      %p61 = por %p59, %p60
      %p62 = scmp.ne.s32.totalorder %s48, %s49
      %p63 = scmp.eq.s32.totalorder %s27, 3
      %p64 = por %p62, %p63
      %p66 = scmp.ne.s32.totalorder %s49, %s65
      %p67 = scmp.eq.s32.totalorder %s27, 0
      %p68 = por %p66, %p67
      %s70 = sadd.s32 %s69, 1
      %p73 = scmp.eq.s32.totalorder %s21, 3
      %p74 = scmp.ne.s32.totalorder %s69, %s71
      %p75 = scmp.eq.s32.totalorder %s21, 0
      %p76 = por %p74, %p75
      %p77 = scmp.ne.s32.totalorder %s69, %s71
      %p78 = scmp.eq.s32.totalorder %s26, 3
      %p79 = por %p77, %p78
      %p80 = scmp.ne.s32.totalorder %s71, %s72
      %p81 = scmp.eq.s32.totalorder %s26, 0
      %p82 = por %p80, %p81
      %p83 = scmp.ne.s32.totalorder %s71, %s72
      %p84 = scmp.eq.s32.totalorder %s27, 3
      %p85 = por %p83, %p84
      %p87 = scmp.ne.s32.totalorder %s72, %s86
      %p88 = scmp.eq.s32.totalorder %s27, 0
      %p89 = por %p87, %p88
      %s90 = ssub.s32 %s28, %s40
      %s91 = ssub.s32 %s29, %s36
      %s92 = sor.u32 %s90, %s91
      %p93 = scmp.eq.s32.totalorder %s92, 0
      %s95 = sadd.s32 %s94, 1
      %s96 = scalar_select %p93, %s94, %s95
      %p99 = pneg %p93
      %p100 = scmp.eq.s32.totalorder %s21, 3
      %p101 = por %p99, %p100
      %p102 = scmp.ne.s32.totalorder %s94, %s97
      %p103 = scmp.eq.s32.totalorder %s21, 0
      %p104 = por %p102, %p103
      %p105 = scmp.ne.s32.totalorder %s94, %s97
      %p106 = scmp.eq.s32.totalorder %s26, 3
      %p107 = por %p105, %p106
      %p108 = scmp.ne.s32.totalorder %s97, %s98
      %p109 = scmp.eq.s32.totalorder %s26, 0
      %p110 = por %p108, %p109
      %p111 = scmp.ne.s32.totalorder %s97, %s98
      %p112 = scmp.eq.s32.totalorder %s27, 3
      %p113 = por %p111, %p112
      %p115 = scmp.ne.s32.totalorder %s98, %s114
      %p116 = scmp.eq.s32.totalorder %s27, 0
      %p117 = por %p115, %p116
      %s118 = ssub.s32 %s28, %s40
      %s119 = ssub.s32 %s29, %s36
      %s120 = sor.u32 %s118, %s119
      %p121 = scmp.eq.s32.totalorder %s120, 0
      %s123 = sadd.s32 %s122, 1
      %s124 = scalar_select %p121, %s122, %s123
      %p127 = pneg %p121
      %p128 = scmp.eq.s32.totalorder %s21, 3
      %p129 = por %p127, %p128
      %p130 = scmp.ne.s32.totalorder %s122, %s125
      %p131 = scmp.eq.s32.totalorder %s21, 0
      %p132 = por %p130, %p131
      %p133 = scmp.ne.s32.totalorder %s122, %s125
      %p134 = scmp.eq.s32.totalorder %s26, 3
      %p135 = por %p133, %p134
      %p136 = scmp.ne.s32.totalorder %s125, %s126
      %p137 = scmp.eq.s32.totalorder %s26, 0
      %p138 = por %p136, %p137
      %p139 = scmp.ne.s32.totalorder %s125, %s126
      %p140 = scmp.eq.s32.totalorder %s27, 3
      %p141 = por %p139, %p140
      %p143 = scmp.ne.s32.totalorder %s126, %s142
      %p144 = scmp.eq.s32.totalorder %s27, 0
      %p145 = por %p143, %p144
      %s146 = ssub.s32 %s28, %s40
      %s147 = ssub.s32 %s29, %s36
      %s148 = sor.u32 %s146, %s147
      %p149 = scmp.eq.s32.totalorder %s148, 0
      %s151 = sadd.s32 %s150, 1
      %s152 = scalar_select %p149, %s150, %s151
      %p155 = pneg %p149
      %p156 = scmp.eq.s32.totalorder %s21, 3
      %p157 = por %p155, %p156
      %p158 = scmp.ne.s32.totalorder %s150, %s153
      %p159 = scmp.eq.s32.totalorder %s21, 0
      %p160 = por %p158, %p159
      %p161 = scmp.ne.s32.totalorder %s150, %s153
      %p162 = scmp.eq.s32.totalorder %s26, 3
      %p163 = por %p161, %p162
      %p164 = scmp.ne.s32.totalorder %s153, %s154
      %p165 = scmp.eq.s32.totalorder %s26, 0
      %p166 = por %p164, %p165
      %p167 = scmp.ne.s32.totalorder %s153, %s154
      %p168 = scmp.eq.s32.totalorder %s27, 3
      %p169 = por %p167, %p168
      %p171 = scmp.ne.s32.totalorder %s154, %s170
      %p172 = scmp.eq.s32.totalorder %s27, 0
      %p173 = por %p171, %p172
      %p174 = scmp.le.s32.totalorder 1, %s21
      %p175 = scmp.lt.s32.totalorder %s21, 5
      %p176 = pnand %p174, %p175
      %p177 = pneg %p176
      // Predicated region
      $region9: #{tpu_custom_call.1} parent=5 // pred_check
        _
      $region10: #{tpu_custom_call.1} parent=5 // pred_check_branch
        %179 = sbr.rel (%p176) target = $region12
      $region11: #{tpu_custom_call.1} parent=5 // pred_region
        %s180 = ssub.s32 %s21, 1
        // Predicated region
        $region13: #{tpu_custom_call.1} parent=11 // pred_check
          %p181 = pneg %p82
        $region14: #{tpu_custom_call.1} parent=11 // pred_check_branch
          %183 = sbr.rel (%p181) target = $region16
        $region15: #{tpu_custom_call.1} parent=11 // pred_region
          %s185 = ssub.s32 1536, 1536
          %186 = vsyncadd [#allocation6], %s185
          %s187 = sshll.u32 [#allocation5], 4
          %s188 = int_to_ptr.vmem [resolvable:$true] %s187
          %193 = dma.hbm_to_vmem [thread:$0]  %s1, 1536, %s188, [#allocation6], 384, 384, 24
        $region16: #{tpu_custom_call.1} parent=11 // pred_fallthru
          _
      $region12: #{tpu_custom_call.1} parent=5 // pred_fallthru
        _
      %p194 = scmp.lt.s32.totalorder %s21, 4
      // Predicated region
      $region17: #{tpu_custom_call.1} parent=5 // pred_check
        %p195 = pneg %p194
      $region18: #{tpu_custom_call.1} parent=5 // pred_check_branch
        %197 = sbr.rel (%p195) target = $region20
      $region19: #{tpu_custom_call.1} parent=5 // pred_region
        // Predicated region
        $region21: #{tpu_custom_call.1} parent=19 // pred_check
          %p198 = pneg %p55
        $region22: #{tpu_custom_call.1} parent=19 // pred_check_branch
          %200 = sbr.rel (%p198) target = $region24
        $region23: #{tpu_custom_call.1} parent=19 // pred_region
          %s201 = sand.u32 %s45, 1
          %s202 = scalar_lea.sflag [#allocation3], %s201
          %s203 = sand.u32 %s45, 1
          %s204 = smul.addr %s203, 8
          %s205 = scalar_lea.vmem [#allocation2], %s204
          %s207 = ssub.s32 128, 128
          %208 = vsyncadd %s202, %s207
          %s209 = smul.addr %s28, 2
          %s210 = sadd.s32 %s29, %s209
          %s211 = smul.addr %s210, 128
          %s212 = scalar_lea.hbm %s0, %s211
          %s214 = sshll.u32 %s205, 4
          %s215 = int_to_ptr.vmem [resolvable:$true] %s214
          %217 = dma.hbm_to_vmem [thread:$0]  %s212, 128, %s215, %s202
        $region24: #{tpu_custom_call.1} parent=19 // pred_fallthru
          _
      $region20: #{tpu_custom_call.1} parent=5 // pred_fallthru
        _
      %p218 = scmp.le.s32.totalorder 1, %s21
      %p219 = scmp.lt.s32.totalorder %s21, 5
      %p220 = pnand %p218, %p219
      %p221 = pneg %p220
      // Predicated region
      $region25: #{tpu_custom_call.1} parent=5 // pred_check
        _
      $region26: #{tpu_custom_call.1} parent=5 // pred_check_branch
        %223 = sbr.rel (%p220) target = $region28
      $region27: #{tpu_custom_call.1} parent=5 // pred_region
        %s224 = ssub.s32 %s21, 1
        %s225 = sand.u32 %s48, 1
        %s226 = scalar_lea.sflag [#allocation3], %s225
        %s227 = sand.u32 %s48, 1
        %s228 = smul.addr %s227, 8
        %s229 = scalar_lea.vmem [#allocation2], %s228
        // Predicated region
        $region29: #{tpu_custom_call.1} parent=27 // pred_check
          %p230 = pneg %p61
        $region30: #{tpu_custom_call.1} parent=27 // pred_check_branch
          %232 = sbr.rel (%p230) target = $region32
        $region31: #{tpu_custom_call.1} parent=27 // pred_region
          %233 = dma.done %s226, 128
        $region32: #{tpu_custom_call.1} parent=27 // pred_fallthru
          _
        // Predicated region
        $region33: #{tpu_custom_call.1} parent=27 // pred_check
          %p234 = pneg %p82
        $region34: #{tpu_custom_call.1} parent=27 // pred_check_branch
          %236 = sbr.rel (%p234) target = $region36
        $region35: #{tpu_custom_call.1} parent=27 // pred_region
          %237 = dma.done [#allocation6], 1536
        $region36: #{tpu_custom_call.1} parent=27 // pred_fallthru
          _
        %s238 = sand.u32 %s48, 1
        %s239 = scalar_lea.sflag [#allocation3], %s238
        %s240 = sand.u32 %s48, 1
        %s241 = smul.addr %s240, 8
        %s242 = scalar_lea.vmem [#allocation2], %s241
        %p243 = pneg %p61
        %p244 = pneg %p58
        %p245 = pneg %p82
        %p246 = pneg %p79
        %p247 = pneg %p110
        %p248 = pneg %p107
        %s249 = sand.u32 %s97, 1
        %s250 = scalar_lea.sflag [#allocation4], %s249
        %s251 = sand.u32 %s97, 1
        %s252 = smul.addr %s251, 8
        %s253 = scalar_lea.vmem [#allocation7], %s252
        %p254 = pneg %p138
        %p255 = pneg %p135
        %s256 = sand.u32 %s26, 1
        %s257 = scalar_lea.sflag [#allocation9], %s256
        %s258 = sand.u32 %s125, 1
        %s259 = smul.addr %s258, 8
        %s260 = scalar_lea.vmem [#allocation8], %s259
        %p261 = pneg %p166
        %p262 = pneg %p163
        %s263 = sand.u32 %s26, 1
        %s264 = scalar_lea.sflag [#allocation9], %s263
        %s265 = sand.u32 %s153, 1
        %s266 = smul.addr %s265, 8
        %s267 = scalar_lea.vmem [#allocation10], %s266
        %v268 = vld [vmem:[%s229] sm:$0xff]
        %v269 = vld [vmem:[#allocation5] sm:$0xff]
        %v270 = vld [vmem:[#allocation5 + $0x8] sm:$0xff]
        %v271 = vld [vmem:[#allocation5 + $0x10] sm:$0xff]
        %v272 = vld [vmem:[#allocation5 + $0x18] sm:$0xff]
        %v273 = vld [vmem:[#allocation5 + $0x20] sm:$0xff]
        %v274 = vld [vmem:[#allocation5 + $0x28] sm:$0xff]
        %v275 = vld [vmem:[#allocation5 + $0x30] sm:$0xff]
        %v276 = vld [vmem:[#allocation5 + $0x38] sm:$0xff]
        %v277 = vld [vmem:[#allocation5 + $0x40] sm:$0xff]
        %v278 = vld [vmem:[#allocation5 + $0x48] sm:$0xff]
        %v279 = vld [vmem:[#allocation5 + $0x50] sm:$0xff]
        %v280 = vld [vmem:[#allocation5 + $0x58] sm:$0xff]
        %vm281 = vcmask 261120
        %v283 = vsel %vm281, %v268, 0
        %285 = vmatprep.subr.mxu0 0.0
        %286 = vmatpush1.msra.mxu0 0.0
        %287 = vmatprep.subr.mxu0 0.0
        %288 = vmatpush1.msra.mxu0 0.0
        %289 = vmatprep.subr.mxu0 0.0
        %290 = vmatpush1.msra.mxu0 0.0
        %291 = vmatprep.subr.mxu0 0.0
        %292 = vmatpush1.msra.mxu0 0.0
        %293 = vmatprep.subr.mxu0 0.0
        %294 = vmatpush1.msra.mxu0 0.0
        %295 = vmatprep.subr.mxu0 0.0
        %296 = vmatpush1.msra.mxu0 0.0
        %297 = vmatprep.subr.mxu0 0.0
        %298 = vmatpush1.msra.mxu0 0.0
        %299 = vmatprep.subr.mxu0 0.0
        %300 = vmatpush1.msra.mxu0 0.0
        %301 = vmatprep.subr.mxu0 0.0
        %302 = vmatpush1.msra.mxu0 0.0
        %303 = vmatprep.subr.mxu0 0.0
        %304 = vmatpush1.msra.mxu0 0.0
        %305 = vmatprep.subr.mxu0 0.0
        %306 = vmatpush1.msra.mxu0 0.0
        %307 = vmatprep.subr.mxu0 0.0
        %308 = vmatpush1.msra.mxu0 0.0
        %309 = vmatprep.subr.mxu0 %v279
        %310 = vmatpush1.msra.mxu0 %v278
        %311 = vmatprep.subr.mxu0 %v276
        %312 = vmatpush1.msra.mxu0 %v275
        %313 = vmatprep.subr.mxu0 %v273
        %314 = vmatpush1.msra.mxu0 %v272
        %315 = vmatprep.subr.mxu0 %v270
        %316 = vmatpush1.msra.mxu0 %v269
        %317 = vmatprep.subr.mxu0 0.0
        %318 = vmatpush2.msra.mxu0 0.0
        %319 = vmatprep.subr.mxu0 0.0
        %320 = vmatpush2.msra.mxu0 0.0
        %321 = vmatprep.subr.mxu0 0.0
        %322 = vmatpush2.msra.mxu0 0.0
        %323 = vmatprep.subr.mxu0 0.0
        %324 = vmatpush2.msra.mxu0 0.0
        %325 = vmatprep.subr.mxu0 0.0
        %326 = vmatpush2.msra.mxu0 0.0
        %327 = vmatprep.subr.mxu0 0.0
        %328 = vmatpush2.msra.mxu0 0.0
        %329 = vmatprep.subr.mxu0 0.0
        %330 = vmatpush2.msra.mxu0 0.0
        %331 = vmatprep.subr.mxu0 0.0
        %332 = vmatpush2.msra.mxu0 0.0
        %333 = vmatprep.subr.mxu0 0.0
        %334 = vmatpush2.msra.mxu0 0.0
        %335 = vmatprep.subr.mxu0 0.0
        %336 = vmatpush2.msra.mxu0 0.0
        %337 = vmatprep.subr.mxu0 0.0
        %338 = vmatpush2.msra.mxu0 0.0
        %339 = vmatprep.subr.mxu0 0.0
        %340 = vmatpush2.msra.mxu0 0.0
        %341 = vmatprep.subr.mxu0 0.0
        %342 = vmatpush2.msra.mxu0 0.0
        %343 = vmatprep.subr.mxu0 0.0
        %344 = vmatpush2.msra.mxu0 0.0
        %345 = vmatprep.subr.mxu0 0.0
        %346 = vmatpush2.msra.mxu0 0.0
        %347 = vmatprep.subr.mxu0 0.0
        %348 = vmatpush2.msra.mxu0 0.0
        %349 = vmatprep.mubr.f32.mxu0 0.0
        %350 = vmatmul.mubr.f32.gmra.mxu0 %v283
        %v351 = vpop.f32.mrf.mxu0
        %v352 = vadd.f32 0.0, %v351
        %v353 = vpop.f32.mrf.mxu0
        %v354 = vadd.f32 0.0, %v353
        %355 = vdwg.mxu0
        %356 = vmatprep.subr.mxu0 0.0
        %357 = vmatpush1.msra.mxu0 0.0
        %358 = vmatprep.subr.mxu0 0.0
        %359 = vmatpush1.msra.mxu0 0.0
        %360 = vmatprep.subr.mxu0 0.0
        %361 = vmatpush1.msra.mxu0 0.0
        %362 = vmatprep.subr.mxu0 0.0
        %363 = vmatpush1.msra.mxu0 0.0
        %364 = vmatprep.subr.mxu0 0.0
        %365 = vmatpush1.msra.mxu0 0.0
        %366 = vmatprep.subr.mxu0 0.0
        %367 = vmatpush1.msra.mxu0 0.0
        %368 = vmatprep.subr.mxu0 0.0
        %369 = vmatpush1.msra.mxu0 0.0
        %370 = vmatprep.subr.mxu0 0.0
        %371 = vmatpush1.msra.mxu0 0.0
        %372 = vmatprep.subr.mxu0 0.0
        %373 = vmatpush1.msra.mxu0 0.0
        %374 = vmatprep.subr.mxu0 0.0
        %375 = vmatpush1.msra.mxu0 0.0
        %376 = vmatprep.subr.mxu0 0.0
        %377 = vmatpush1.msra.mxu0 0.0
        %378 = vmatprep.subr.mxu0 0.0
        %379 = vmatpush1.msra.mxu0 0.0
        %380 = vmatprep.subr.mxu0 0.0
        %381 = vmatpush1.msra.mxu0 %v280
        %382 = vmatprep.subr.mxu0 0.0
        %383 = vmatpush1.msra.mxu0 %v277
        %384 = vmatprep.subr.mxu0 0.0
        %385 = vmatpush1.msra.mxu0 %v274
        %386 = vmatprep.subr.mxu0 0.0
        %387 = vmatpush1.msra.mxu0 %v271
        %388 = vmatprep.subr.mxu0 0.0
        %389 = vmatpush2.msra.mxu0 0.0
        %390 = vmatprep.subr.mxu0 0.0
        %391 = vmatpush2.msra.mxu0 0.0
        %392 = vmatprep.subr.mxu0 0.0
        %393 = vmatpush2.msra.mxu0 0.0
        %394 = vmatprep.subr.mxu0 0.0
        %395 = vmatpush2.msra.mxu0 0.0
        %396 = vmatprep.subr.mxu0 0.0
        %397 = vmatpush2.msra.mxu0 0.0
        %398 = vmatprep.subr.mxu0 0.0
        %399 = vmatpush2.msra.mxu0 0.0
        %400 = vmatprep.subr.mxu0 0.0
        %401 = vmatpush2.msra.mxu0 0.0
        %402 = vmatprep.subr.mxu0 0.0
        %403 = vmatpush2.msra.mxu0 0.0
        %404 = vmatprep.subr.mxu0 0.0
        %405 = vmatpush2.msra.mxu0 0.0
        %406 = vmatprep.subr.mxu0 0.0
        %407 = vmatpush2.msra.mxu0 0.0
        %408 = vmatprep.subr.mxu0 0.0
        %409 = vmatpush2.msra.mxu0 0.0
        %410 = vmatprep.subr.mxu0 0.0
        %411 = vmatpush2.msra.mxu0 0.0
        %412 = vmatprep.subr.mxu0 0.0
        %413 = vmatpush2.msra.mxu0 0.0
        %414 = vmatprep.subr.mxu0 0.0
        %415 = vmatpush2.msra.mxu0 0.0
        %416 = vmatprep.subr.mxu0 0.0
        %417 = vmatpush2.msra.mxu0 0.0
        %418 = vmatprep.subr.mxu0 0.0
        %419 = vmatpush2.msra.mxu0 0.0
        %420 = vmatprep.mubr.f32.mxu0 0.0
        %421 = vmatmul.mubr.f32.gmra.mxu0 %v283
        %v422 = vpop.f32.mrf.mxu0
        %v423 = vadd.f32 0.0, %v422
        %v424 = vpop.f32.mrf.mxu0
        %425 = vdwg.mxu0
        %v426 = vmul.f32 %v352, 0.17677669
        %427 = vst [vmem:[%s253] sm:$0xff] %v426
        %428 = vst [vmem:[%s260] sm:$0xff] %v354
        %429 = vst [vmem:[%s267] sm:$0xff] %v423
        %s430 = sand.u32 %s97, 1
        %s431 = scalar_lea.sflag [#allocation4], %s430
        %s432 = sand.u32 %s97, 1
        %s433 = smul.addr %s432, 8
        %s434 = scalar_lea.vmem [#allocation7], %s433
        %s435 = sand.u32 %s26, 1
        %s436 = scalar_lea.sflag [#allocation9], %s435
        %s437 = sand.u32 %s125, 1
        %s438 = smul.addr %s437, 8
        %s439 = scalar_lea.vmem [#allocation8], %s438
        %s440 = sand.u32 %s26, 1
        %s441 = scalar_lea.sflag [#allocation9], %s440
        %s442 = sand.u32 %s153, 1
        %s443 = smul.addr %s442, 8
        %s444 = scalar_lea.vmem [#allocation10], %s443
        // Predicated region
        $region37: #{tpu_custom_call.1} parent=27 // pred_check
          %p445 = pneg %p107
        $region38: #{tpu_custom_call.1} parent=27 // pred_check_branch
          %447 = sbr.rel (%p445) target = $region40
        $region39: #{tpu_custom_call.1} parent=27 // pred_region
          %s449 = ssub.s32 128, 128
          %450 = vsyncadd %s431, %s449
          %s451 = smul.addr %s30, 2
          %s452 = sadd.s32 %s31, %s451
          %s453 = smul.addr %s452, 128
          %s454 = scalar_lea.hbm %s2, %s453
          %s456 = sshll.u32 %s434, 4
          %s457 = int_to_ptr.vmem [resolvable:$true] %s456
          %459 = dma.vmem_to_hbm [thread:$0]  %s457, 128, %s454, %s431
        $region40: #{tpu_custom_call.1} parent=27 // pred_fallthru
          _
        // Predicated region
        $region41: #{tpu_custom_call.1} parent=27 // pred_check
          %p460 = pneg %p135
        $region42: #{tpu_custom_call.1} parent=27 // pred_check_branch
          %462 = sbr.rel (%p460) target = $region44
        $region43: #{tpu_custom_call.1} parent=27 // pred_region
          %s464 = ssub.s32 128, 128
          %465 = vsyncadd %s436, %s464
          %s466 = smul.addr %s30, 2
          %s467 = sadd.s32 %s31, %s466
          %s468 = smul.addr %s467, 128
          %s469 = scalar_lea.hbm %s3, %s468
          %s471 = sshll.u32 %s439, 4
          %s472 = int_to_ptr.vmem [resolvable:$true] %s471
          %474 = dma.vmem_to_hbm [thread:$0]  %s472, 128, %s469, %s436
        $region44: #{tpu_custom_call.1} parent=27 // pred_fallthru
          _
        // Predicated region
        $region45: #{tpu_custom_call.1} parent=27 // pred_check
          %p475 = pneg %p163
        $region46: #{tpu_custom_call.1} parent=27 // pred_check_branch
          %477 = sbr.rel (%p475) target = $region48
        $region47: #{tpu_custom_call.1} parent=27 // pred_region
          %s479 = ssub.s32 128, 128
          %480 = vsyncadd %s441, %s479
          %s481 = smul.addr %s30, 2
          %s482 = sadd.s32 %s31, %s481
          %s483 = smul.addr %s482, 128
          %s484 = scalar_lea.hbm %s4, %s483
          %s486 = sshll.u32 %s444, 4
          %s487 = int_to_ptr.vmem [resolvable:$true] %s486
          %489 = dma.vmem_to_hbm [thread:$0]  %s487, 128, %s484, %s441
        $region48: #{tpu_custom_call.1} parent=27 // pred_fallthru
          _
      $region28: #{tpu_custom_call.1} parent=5 // pred_fallthru
        _
      %p490 = scmp.le.s32.totalorder 2, %s21
      // Predicated region
      $region49: #{tpu_custom_call.1} parent=5 // pred_check
        %p491 = pneg %p490
      $region50: #{tpu_custom_call.1} parent=5 // pred_check_branch
        %493 = sbr.rel (%p491) target = $region52
      $region51: #{tpu_custom_call.1} parent=5 // pred_region
        %s494 = ssub.s32 %s21, 2
        // Predicated region
        $region53: #{tpu_custom_call.1} parent=51 // pred_check
          %p495 = pneg %p113
        $region54: #{tpu_custom_call.1} parent=51 // pred_check_branch
          %497 = sbr.rel (%p495) target = $region56
        $region55: #{tpu_custom_call.1} parent=51 // pred_region
          %s498 = sand.u32 %s98, 1
          %s499 = scalar_lea.sflag [#allocation4], %s498
          %s500 = sand.u32 %s98, 1
          %s501 = smul.addr %s500, 8
          %s502 = scalar_lea.vmem [#allocation7], %s501
          %503 = dma.done %s499, 128
        $region56: #{tpu_custom_call.1} parent=51 // pred_fallthru
          _
        // Predicated region
        $region57: #{tpu_custom_call.1} parent=51 // pred_check
          %p504 = pneg %p141
        $region58: #{tpu_custom_call.1} parent=51 // pred_check_branch
          %506 = sbr.rel (%p504) target = $region60
        $region59: #{tpu_custom_call.1} parent=51 // pred_region
          %s507 = sand.u32 %s27, 1
          %s508 = scalar_lea.sflag [#allocation9], %s507
          %s509 = sand.u32 %s126, 1
          %s510 = smul.addr %s509, 8
          %s511 = scalar_lea.vmem [#allocation8], %s510
          %512 = dma.done %s508, 128
        $region60: #{tpu_custom_call.1} parent=51 // pred_fallthru
          _
        // Predicated region
        $region61: #{tpu_custom_call.1} parent=51 // pred_check
          %p513 = pneg %p169
        $region62: #{tpu_custom_call.1} parent=51 // pred_check_branch
          %515 = sbr.rel (%p513) target = $region64
        $region63: #{tpu_custom_call.1} parent=51 // pred_region
          %s516 = sand.u32 %s27, 1
          %s517 = scalar_lea.sflag [#allocation9], %s516
          %s518 = sand.u32 %s154, 1
          %s519 = smul.addr %s518, 8
          %s520 = scalar_lea.vmem [#allocation10], %s519
          %521 = dma.done %s517, 128
        $region64: #{tpu_custom_call.1} parent=51 // pred_fallthru
          _
      $region52: #{tpu_custom_call.1} parent=5 // pred_fallthru
        _
    $region6: #{tpu_custom_call.1} parent=1 // loop_footer
      %s25 = sadd.s32 1, %s21
    $region7: #{tpu_custom_call.1} parent=1 // loop_footer_branch
      %20 = sbr.rel target = $region3
    $region8: #{tpu_custom_call.1} parent=1 // loop_exit
      _
    %522 = vsyncpa [#allocation3], 1
    %s523 = scalar_lea.sflag [#allocation3], 1
    %524 = vsyncpa %s523, 1
    %525 = vsyncpa [#allocation6], 1
    %526 = vsyncpa [#allocation4], 1
    %s527 = scalar_lea.sflag [#allocation4], 1
    %528 = vsyncpa %s527, 1
    %529 = vsyncpa [#allocation9], 1
    %s530 = scalar_lea.sflag [#allocation9], 1
    %531 = vsyncpa %s530, 1

</llo_original>
